<compile_context>
chip_gen: v6e
topology: v6e:2x2x1
jax: 0.10.0
libtpu: 0.0.40
codegen_flags: <defaults>
</compile_context>

<pallas_src>
import functools

import jax
import jax.numpy as jnp
from jax.experimental import pallas as pl
from jax.experimental.pallas import tpu as pltpu


def _round_up(x, m):
    return (x + m - 1) // m * m


def _vmem_capacity_bytes():
    """Trace-time VMEM query, used only to pick tile / scoped-vmem budgets."""
    try:
        return int(pltpu.get_tpu_info().vmem_capacity_bytes)
    except Exception:
        return 64 * 1024 * 1024  # conservative default (v7x per-TensorCore VMEM)


def _lwr_kernel(*refs, tau, total_b, block_b, mask_rows, compute_kl, compute_soft):
    """Fused LWR losses over one (block_b, C) row tile (class axis native width).

    Ref order (static flags select which are present):
      inputs : logits (bb, C), y (bb, 1) int32, [prev (bb, C) bf16 iff compute_kl]
      outputs: [soft (bb, C) bf16 iff compute_soft],
               ce_part (1, 1, 1) f32, [kl_part (1, 1, 1) f32 iff compute_kl]

    Per-block partial sums are emitted (no cross-block scratch / state), so the
    batch-block grid axis is fully "parallel" (v7x can shard it across both
    TensorCores); the wrapper finishes the batchmean reduction.
    """
    it = iter(refs)
    logits_ref = next(it)
    y_ref = next(it)
    prev_ref = next(it) if compute_kl else None
    soft_ref = next(it) if compute_soft else None
    ce_ref = next(it)
    kl_ref = next(it) if compute_kl else None

    i = pl.program_id(0)

    x = logits_ref[...].astype(jnp.float32)            # (bb, C), f32 math in-regs
    bb, c = x.shape

    if mask_rows:
        row = jax.lax.broadcasted_iota(jnp.int32, (bb, 1), 0) + i * block_b
        row_valid = row < total_b                       # ragged batch tail
        x = jnp.where(row_valid, x, 0.0)

    def _mask(v):
        return jnp.where(row_valid, v, 0.0) if mask_rows else v

    # ---- hard-label CE: (m + log s) - x[y]; no one-hot f32, no full log-softmax
    y = y_ref[...]                                      # (bb, 1) int32
    col = jax.lax.broadcasted_iota(jnp.int32, (bb, c), 1)
    x_y = jnp.sum(jnp.where(col == y, x, 0.0), axis=1, keepdims=True)
    m = jnp.max(x, axis=1, keepdims=True)
    s = jnp.sum(jnp.exp(x - m), axis=1, keepdims=True)
    ce_per = (m + jnp.log(s)) - x_y                     # (bb, 1) = -log_softmax(x)[y]
    ce_ref[...] = jnp.sum(_mask(ce_per), keepdims=True).reshape(1, 1, 1)

    if compute_soft or compute_kl:
        # ---- temperature softmax / log-softmax; reuse the CE max (tau > 0) ----
        inv_tau = 1.0 / tau
        xt = x * inv_tau
        mt = m * inv_tau                                # == max(x / tau)
        et = jnp.exp(xt - mt)
        st = jnp.sum(et, axis=1, keepdims=True)
        if compute_soft:
            # Exact divide: these soft labels persist in the retrospection
            # buffer and later pass through log() in the KL path.
            soft_ref[...] = (et / st).astype(soft_ref.dtype)
        if compute_kl:
            logpt = (xt - mt) - jnp.log(st)             # log_softmax(x / tau)
            t = _mask(prev_ref[...].astype(jnp.float32))
            safe_t = jnp.where(t > 0.0, t, 1.0)
            kl_elem = jnp.where(t > 0.0, t * (jnp.log(safe_t) - logpt), 0.0)
            kl_ref[...] = jnp.sum(kl_elem, keepdims=True).reshape(1, 1, 1)


@functools.partial(
    jax.jit, static_argnames=("tau", "compute_kl", "compute_soft", "block_rows"))
def lwr_losses(logits, y_idx, prev_soft=None, *, tau,
               compute_kl=False, compute_soft=False, block_rows=None):
    """Returns (softmax(logits/tau) as bf16 or None, cross_entropy, kl_div or None)."""
    B, C = logits.shape
    if compute_kl:
        assert prev_soft is not None

    # VMEM stores the class axis lane-padded to 128; budget tiles against that.
    C_lane = max(128, _round_up(C, 128))
    vmem_cap = _vmem_capacity_bytes()
    big_vmem = vmem_cap >= 100 * 1024 * 1024            # v5e/v6e (128 MiB) vs v7x (64 MiB)
    vmem_limit = (96 if big_vmem else 48) * 1024 * 1024
    # Per-stream f32 tile target: ~8 MiB on v5e/v6e, ~4 MiB on v7x so 2-3
    # double-buffered streams stay comfortably inside scoped VMEM.
    max_tile_elems = (2 if big_vmem else 1) * 1024 * 1024

    if block_rows is not None:
        block_b = min(int(block_rows), B)               # test / tuning override
    else:
        cap = max(64, min(((max_tile_elems // C_lane) // 64) * 64, 4096))
        block_b = B if B <= cap else cap                # full dim, or 64-aligned
    mask_rows = (B % block_b) != 0
    num_blocks = pl.cdiv(B, block_b)

    kernel = functools.partial(
        _lwr_kernel, tau=float(tau), total_b=B, block_b=block_b,
        mask_rows=mask_rows, compute_kl=compute_kl, compute_soft=compute_soft)

    row_spec = pl.BlockSpec((block_b, C), lambda i: (i, 0))
    part_spec = pl.BlockSpec((1, 1, 1), lambda i: (i, 0, 0))

    in_specs = [row_spec, pl.BlockSpec((block_b, 1), lambda i: (i, 0))]
    args = [logits, y_idx.reshape(B, 1).astype(jnp.int32)]
    if compute_kl:
        in_specs.append(row_spec)
        args.append(prev_soft)

    out_specs, out_shapes = [], []
    if compute_soft:
        out_specs.append(row_spec)
        out_shapes.append(jax.ShapeDtypeStruct((B, C), jnp.bfloat16))
    out_specs.append(part_spec)                         # per-block CE partial sums
    out_shapes.append(jax.ShapeDtypeStruct((num_blocks, 1, 1), jnp.float32))
    if compute_kl:
        out_specs.append(part_spec)                     # per-block KL partial sums
        out_shapes.append(jax.ShapeDtypeStruct((num_blocks, 1, 1), jnp.float32))

    results = pl.pallas_call(
        kernel,
        grid=(num_blocks,),
        in_specs=in_specs,
        out_specs=out_specs,
        out_shape=out_shapes,
        compiler_params=pltpu.CompilerParams(
            # No cross-block state (partials per block) -> fully parallel axis,
            # so multi-TensorCore chips (v7x) can shard the batch blocks.
            dimension_semantics=("parallel",),
            vmem_limit_bytes=vmem_limit,
        ),
    )(*args)

    idx = 0
    soft = None
    if compute_soft:
        soft = results[idx]
        idx += 1
    inv_b = 1.0 / float(B)                              # batchmean over the FULL batch
    ce = jnp.sum(results[idx]) * inv_b
    idx += 1
    kl = jnp.sum(results[idx]) * inv_b if compute_kl else None
    return soft, ce, kl


@functools.partial(jax.jit, donate_argnums=(0,))
def _update_labels(labels, batch_idx, soft):
    # Donated buffer -> in-place row scatter: O(B*C) HBM traffic instead of
    # copying the whole (dataset_length, C) retrospection buffer.
    # TODO(synk): when batch_idx is a contiguous arange slice, write `soft`
    # straight into the donated labels buffer from the kernel via
    # input_output_aliases + a prefetched start-row index_map.
    return labels.at[batch_idx].set(soft.astype(labels.dtype))


class LWR:
    """JAX/Pallas port of the stateful PyTorch LWR module (softmax_dim=1)."""

    def __init__(self, k, num_batches_per_epoch, dataset_length, output_shape,
                 max_epochs, tau=5.0, update_rate=0.9, softmax_dim=1):
        # TODO(synk): softmax_dim != 1 (per-timestep soft cross-entropy over a
        # sequence axis) is not implemented; only the hard-label dim=1 path is.
        assert softmax_dim == 1
        self.k = k
        self.update_rate = update_rate
        self.max_epochs = max_epochs
        self.step_count = 0
        self.epoch_count = 0
        self.num_batches_per_epoch = num_batches_per_epoch
        self.tau = tau
        self.alpha = 1.0
        self.softmax_dim = softmax_dim
        # Retrospection buffer kept in bf16: halves gather/scatter HBM traffic
        # (reference stores f32; soft labels tolerate bf16 rounding).
        self.labels = jnp.zeros((dataset_length, *output_shape), jnp.bfloat16)

    def forward(self, batch_idx, logits, y_true, eval=False):
        self.alpha = 1 - self.update_rate * self.epoch_count * self.k / self.max_epochs

        if self.epoch_count <= self.k:
            # Bookkeeping first (reference ordering), then decide whether this
            # step captures soft labels.
            self.step_count += 1
            if (self.step_count + 1) % self.num_batches_per_epoch == 0 and eval is False:
                self.step_count = 0
                self.epoch_count += 1
            capture = (self.epoch_count == self.k) and (eval is False)
            soft, ce, _ = lwr_losses(logits, y_true, None, tau=self.tau,
                                     compute_kl=False, compute_soft=capture)
            if capture:
                self.labels = _update_labels(self.labels, batch_idx, soft)
            return ce
        else:
            update = ((self.epoch_count + 1) % self.k == 0) and (eval is False)
            if update:
                # Reference overwrites labels[batch_idx] with softmax(logits/tau)
                # *before* the KL term, so KL(target||pred) with target == pred
                # is identically zero -> skip the KL compute entirely.
                soft, ce, _ = lwr_losses(logits, y_true, None, tau=self.tau,
                                         compute_kl=False, compute_soft=True)
                self.labels = _update_labels(self.labels, batch_idx, soft)
                kl = 0.0
            else:
                # TODO(synk): fuse this row gather into the kernel (scalar-prefetched
                # batch_idx + per-row DMA) to drop one more full HBM pass; only
                # worthwhile once C is large enough that per-row DMAs aren't
                # descriptor-bound.
                prev = self.labels[batch_idx]
                _, ce, kl = lwr_losses(logits, y_true, prev, tau=self.tau,
                                       compute_kl=True, compute_soft=False)
            return (self.alpha * ce
                    + (1 - self.alpha) * self.tau * self.tau * kl)


if __name__ == "__main__":
    B, C = 8, 32
    key = jax.random.PRNGKey(0)
    k_logits, k_labels = jax.random.split(key)

    def make_batch(step, b=B):
        logits = jax.random.normal(jax.random.fold_in(k_logits, step), (b, C),
                                   dtype=jnp.float32)
        y_true = jax.random.randint(jax.random.fold_in(k_labels, step), (b,), 0, C)
        return logits, y_true

    # --- direct kernel check vs a pure-JAX reference; forces a small block to
    # exercise the ragged multi-block row-mask / output-clipping path ---------
    def ref_losses(logits, y, prev, tau):
        logp = jax.nn.log_softmax(logits, axis=1)
        ce = -jnp.take_along_axis(logp, y[:, None], axis=1).mean()
        logpt = jax.nn.log_softmax(logits / tau, axis=1)
        t = prev.astype(jnp.float32)
        kl = jnp.sum(jnp.where(t > 0, t * (jnp.log(jnp.where(t > 0, t, 1.0)) - logpt),
                               0.0)) / logits.shape[0]
        return jax.nn.softmax(logits / tau, axis=1), ce, kl

    Bt = 12
    lg, yt = make_batch(999, b=Bt)
    pv = jax.nn.softmax(
        jax.random.normal(jax.random.fold_in(k_logits, 998), (Bt, C)), axis=1
    ).astype(jnp.bfloat16)
    soft_k, ce_k, kl_k = lwr_losses(lg, yt, pv, tau=5.0, compute_kl=True,
                                    compute_soft=True, block_rows=8)
    soft_r, ce_r, kl_r = ref_losses(lg, yt, pv, 5.0)
    assert jnp.allclose(ce_k, ce_r, rtol=1e-4, atol=1e-4)
    assert jnp.allclose(kl_k, kl_r, rtol=1e-3, atol=1e-5)
    assert jnp.allclose(soft_k.astype(jnp.float32), soft_r, rtol=2e-2, atol=1e-3)

    losses = []

    # Phase coverage A: k=1 exercises plain CE, the soft-label capture epoch and
    # the alpha-mixed update epoch (self-KL == 0, handled host-side).
    lwr_a = LWR(k=1, num_batches_per_epoch=2, dataset_length=32,
                output_shape=(C,), max_epochs=4, tau=5.0, update_rate=0.9)
    for step in range(3):
        logits, y_true = make_batch(step)
        start = (step * B) % 32
        losses.append(lwr_a.forward(jnp.arange(start, start + B), logits, y_true))

    # Phase coverage B: k=3 with a single-batch dataset exercises the
    # retrospection gather + KL-vs-stored-labels path.
    lwr_b = LWR(k=3, num_batches_per_epoch=1, dataset_length=B,
                output_shape=(C,), max_epochs=12, tau=5.0, update_rate=0.9)
    batch_idx = jnp.arange(B)
    for step in range(5):
        logits, y_true = make_batch(100 + step)
        losses.append(lwr_b.forward(batch_idx, logits, y_true))

    losses = [jax.block_until_ready(l) for l in losses]
    assert all(bool(jnp.isfinite(l)) for l in losses)
    print("KERNEL_OK")
</pallas_src>

<mosaic_0001>
module attributes {stable_mosaic.version = 11 : i64} {
  func.func @_lwr_kernel(%arg0: i32, %arg1: memref<8x32xf32, #tpu.memory_space<vmem>>, %arg2: memref<8x1xi32, #tpu.memory_space<vmem>>, %arg3: memref<8x32xbf16, #tpu.memory_space<vmem>>, %arg4: memref<8x32xbf16, #tpu.memory_space<vmem>>, %arg5: memref<1x1x1xf32, #tpu.memory_space<vmem>>, %arg6: memref<1x1x1xf32, #tpu.memory_space<vmem>>) attributes {dimension_semantics = [#tpu.dimension_semantics<parallel>], iteration_bounds = array<i64: 2>, scalar_prefetch = 0 : i64, scratch_operands = 0 : i64, tpu.core_type = #tpu.core_type<tc>, window_params = [{transform_indices = @transform_0, window_bounds = array<i64: 8, 32>}, {transform_indices = @transform_1, window_bounds = array<i64: 8, 1>}, {transform_indices = @transform_2, window_bounds = array<i64: 8, 32>}, {transform_indices = @transform_3, window_bounds = array<i64: 8, 32>}, {transform_indices = @transform_4, window_bounds = array<i64: 1, 1, 1>}, {transform_indices = @transform_5, window_bounds = array<i64: 1, 1, 1>}]} {
    %c0 = arith.constant 0 : index
    %c0_0 = arith.constant 0 : index
    %0 = vector.load %arg1[%c0, %c0_0] : memref<8x32xf32, #tpu.memory_space<vmem>>, vector<8x32xf32>
    %1 = tpu.iota {dimensions = array<i32: 0>} : vector<8x1xi32>
    %c8_i32 = arith.constant 8 : i32
    %2 = arith.muli %arg0, %c8_i32 : i32
    %3 = vector.broadcast %2 : i32 to vector<8x1xi32>
    %4 = arith.addi %1, %3 : vector<8x1xi32>
    %c12_i32 = arith.constant 12 : i32
    %5 = vector.broadcast %c12_i32 : i32 to vector<8x1xi32>
    %6 = arith.cmpi slt, %4, %5 : vector<8x1xi32>
    %cst = arith.constant 0.000000e+00 : f32
    %7 = vector.shape_cast %6 : vector<8x1xi1> to vector<8x1xi1>
    %8 = vector.broadcast %7 : vector<8x1xi1> to vector<8x32xi1>
    %9 = vector.broadcast %cst : f32 to vector<8x32xf32>
    %10 = arith.select %8, %0, %9 : vector<8x32xi1>, vector<8x32xf32>
    %c0_1 = arith.constant 0 : index
    %c0_2 = arith.constant 0 : index
    %11 = vector.load %arg2[%c0_1, %c0_2] : memref<8x1xi32, #tpu.memory_space<vmem>>, vector<8x1xi32>
    %12 = tpu.iota {dimensions = array<i32: 1>} : vector<8x32xi32>
    %13 = vector.broadcast %11 : vector<8x1xi32> to vector<8x32xi32>
    %14 = arith.cmpi eq, %12, %13 : vector<8x32xi32>
    %cst_3 = arith.constant 0.000000e+00 : f32
    %15 = vector.broadcast %cst_3 : f32 to vector<8x32xf32>
    %16 = arith.select %14, %10, %15 : vector<8x32xi1>, vector<8x32xf32>
    %cst_4 = arith.constant dense<0.000000e+00> : vector<8xf32>
    %17 = vector.multi_reduction <add>, %16, %cst_4 [1] : vector<8x32xf32> to vector<8xf32>
    %18 = vector.shape_cast %17 : vector<8xf32> to vector<8x1xf32>
    %cst_5 = arith.constant dense<0xFF800000> : vector<8xf32>
    %19 = vector.multi_reduction <maximumf>, %10, %cst_5 [1] : vector<8x32xf32> to vector<8xf32>
    %20 = vector.shape_cast %19 : vector<8xf32> to vector<8x1xf32>
    %21 = vector.broadcast %20 : vector<8x1xf32> to vector<8x32xf32>
    %22 = arith.subf %10, %21 : vector<8x32xf32>
    %23 = math.exp %22 : vector<8x32xf32>
    %cst_6 = arith.constant dense<0.000000e+00> : vector<8xf32>
    %24 = vector.multi_reduction <add>, %23, %cst_6 [1] : vector<8x32xf32> to vector<8xf32>
    %25 = vector.shape_cast %24 : vector<8xf32> to vector<8x1xf32>
    %26 = math.log %25 : vector<8x1xf32>
    %27 = arith.addf %20, %26 : vector<8x1xf32>
    %28 = arith.subf %27, %18 : vector<8x1xf32>
    %cst_7 = arith.constant 0.000000e+00 : f32
    %29 = vector.broadcast %cst_7 : f32 to vector<8x1xf32>
    %30 = arith.select %6, %28, %29 : vector<8x1xi1>, vector<8x1xf32>
    %31 = vector.shape_cast %30 : vector<8x1xf32> to vector<1x8x1xf32>
    %cst_8 = arith.constant dense<0.000000e+00> : vector<1xf32>
    %32 = vector.multi_reduction <add>, %31, %cst_8 [1, 2] : vector<1x8x1xf32> to vector<1xf32>
    %33 = vector.shape_cast %32 : vector<1xf32> to vector<1x1x1xf32>
    %34 = vector.extract %33[0, 0, 0] : f32 from vector<1x1x1xf32>
    %35 = vector.broadcast %34 : f32 to vector<1x1xf32>
    %36 = vector.shape_cast %35 : vector<1x1xf32> to vector<1x1x1xf32>
    %c0_9 = arith.constant 0 : index
    %c0_10 = arith.constant 0 : index
    %c0_11 = arith.constant 0 : index
    %37 = vector.load %arg5[%c0_9, %c0_10, %c0_11] : memref<1x1x1xf32, #tpu.memory_space<vmem>>, vector<1x1x1xf32>
    tpu.vector_store %arg5[%c0_9, %c0_10, %c0_11], %36 {strides = array<i32>} : memref<1x1x1xf32, #tpu.memory_space<vmem>>, vector<1x1x1xf32>,
    %cst_12 = arith.constant 2.000000e-01 : f32
    %38 = vector.broadcast %cst_12 : f32 to vector<8x32xf32>
    %39 = arith.mulf %10, %38 : vector<8x32xf32>
    %cst_13 = arith.constant 2.000000e-01 : f32
    %40 = vector.broadcast %cst_13 : f32 to vector<8x1xf32>
    %41 = arith.mulf %20, %40 : vector<8x1xf32>
    %42 = vector.broadcast %41 : vector<8x1xf32> to vector<8x32xf32>
    %43 = arith.subf %39, %42 : vector<8x32xf32>
    %44 = math.exp %43 : vector<8x32xf32>
    %cst_14 = arith.constant dense<0.000000e+00> : vector<8xf32>
    %45 = vector.multi_reduction <add>, %44, %cst_14 [1] : vector<8x32xf32> to vector<8xf32>
    %46 = vector.shape_cast %45 : vector<8xf32> to vector<8x1xf32>
    %47 = vector.broadcast %46 : vector<8x1xf32> to vector<8x32xf32>
    %48 = arith.divf %44, %47 : vector<8x32xf32>
    %49 = arith.truncf %48 : vector<8x32xf32> to vector<8x32xbf16>
    %c0_15 = arith.constant 0 : index
    %c0_16 = arith.constant 0 : index
    %50 = vector.load %arg4[%c0_15, %c0_16] : memref<8x32xbf16, #tpu.memory_space<vmem>>, vector<8x32xbf16>
    tpu.vector_store %arg4[%c0_15, %c0_16], %49 {strides = array<i32>} : memref<8x32xbf16, #tpu.memory_space<vmem>>, vector<8x32xbf16>,
    %51 = vector.broadcast %41 : vector<8x1xf32> to vector<8x32xf32>
    %52 = arith.subf %39, %51 : vector<8x32xf32>
    %53 = math.log %46 : vector<8x1xf32>
    %54 = vector.broadcast %53 : vector<8x1xf32> to vector<8x32xf32>
    %55 = arith.subf %52, %54 : vector<8x32xf32>
    %c0_17 = arith.constant 0 : index
    %c0_18 = arith.constant 0 : index
    %56 = vector.load %arg3[%c0_17, %c0_18] : memref<8x32xbf16, #tpu.memory_space<vmem>>, vector<8x32xbf16>
    %57 = arith.extf %56 : vector<8x32xbf16> to vector<8x32xf32>
    %cst_19 = arith.constant 0.000000e+00 : f32
    %58 = vector.shape_cast %6 : vector<8x1xi1> to vector<8x1xi1>
    %59 = vector.broadcast %58 : vector<8x1xi1> to vector<8x32xi1>
    %60 = vector.broadcast %cst_19 : f32 to vector<8x32xf32>
    %61 = arith.select %59, %57, %60 : vector<8x32xi1>, vector<8x32xf32>
    %cst_20 = arith.constant 0.000000e+00 : f32
    %62 = vector.broadcast %cst_20 : f32 to vector<8x32xf32>
    %63 = arith.cmpf ogt, %61, %62 : vector<8x32xf32>
    %cst_21 = arith.constant 1.000000e+00 : f32
    %64 = vector.broadcast %cst_21 : f32 to vector<8x32xf32>
    %65 = arith.select %63, %61, %64 : vector<8x32xi1>, vector<8x32xf32>
    %cst_22 = arith.constant 0.000000e+00 : f32
    %66 = vector.broadcast %cst_22 : f32 to vector<8x32xf32>
    %67 = arith.cmpf ogt, %61, %66 : vector<8x32xf32>
    %68 = math.log %65 : vector<8x32xf32>
    %69 = arith.subf %68, %55 : vector<8x32xf32>
    %70 = arith.mulf %61, %69 : vector<8x32xf32>
    %cst_23 = arith.constant 0.000000e+00 : f32
    %71 = vector.broadcast %cst_23 : f32 to vector<8x32xf32>
    %72 = arith.select %67, %70, %71 : vector<8x32xi1>, vector<8x32xf32>
    %73 = vector.shape_cast %72 : vector<8x32xf32> to vector<1x8x32xf32>
    %cst_24 = arith.constant dense<0.000000e+00> : vector<1xf32>
    %74 = vector.multi_reduction <add>, %73, %cst_24 [1, 2] : vector<1x8x32xf32> to vector<1xf32>
    %75 = vector.shape_cast %74 : vector<1xf32> to vector<1x1x1xf32>
    %76 = vector.extract %75[0, 0, 0] : f32 from vector<1x1x1xf32>
    %77 = vector.broadcast %76 : f32 to vector<1x1xf32>
    %78 = vector.shape_cast %77 : vector<1x1xf32> to vector<1x1x1xf32>
    %c0_25 = arith.constant 0 : index
    %c0_26 = arith.constant 0 : index
    %c0_27 = arith.constant 0 : index
    %79 = vector.load %arg6[%c0_25, %c0_26, %c0_27] : memref<1x1x1xf32, #tpu.memory_space<vmem>>, vector<1x1x1xf32>
    tpu.vector_store %arg6[%c0_25, %c0_26, %c0_27], %78 {strides = array<i32>} : memref<1x1x1xf32, #tpu.memory_space<vmem>>, vector<1x1x1xf32>,
    return
  }
  func.func @transform_0(%arg0: i32) -> (i32, i32) {
    %c0_i32 = arith.constant 0 : i32
    %c0_i32_0 = arith.constant 0 : i32
    return %arg0, %c0_i32 : i32, i32
  }
  func.func @transform_1(%arg0: i32) -> (i32, i32) {
    %c0_i32 = arith.constant 0 : i32
    %c0_i32_0 = arith.constant 0 : i32
    return %arg0, %c0_i32 : i32, i32
  }
  func.func @transform_2(%arg0: i32) -> (i32, i32) {
    %c0_i32 = arith.constant 0 : i32
    %c0_i32_0 = arith.constant 0 : i32
    return %arg0, %c0_i32 : i32, i32
  }
  func.func @transform_3(%arg0: i32) -> (i32, i32) {
    %c0_i32 = arith.constant 0 : i32
    %c0_i32_0 = arith.constant 0 : i32
    return %arg0, %c0_i32 : i32, i32
  }
  func.func @transform_4(%arg0: i32) -> (i32, i32, i32) {
    %c0_i32 = arith.constant 0 : i32
    %c0_i32_0 = arith.constant 0 : i32
    %c0_i32_1 = arith.constant 0 : i32
    return %arg0, %c0_i32, %c0_i32_0 : i32, i32, i32
  }
  func.func @transform_5(%arg0: i32) -> (i32, i32, i32) {
    %c0_i32 = arith.constant 0 : i32
    %c0_i32_0 = arith.constant 0 : i32
    %c0_i32_1 = arith.constant 0 : i32
    return %arg0, %c0_i32, %c0_i32_0 : i32, i32, i32
  }
}

</mosaic_0001>

<llo_original>
// kernel: lwr_losses.1
$region0: #{lwr_losses.1}
  #allocation0 [shape = 'u32[]', space=smem, size = 0x4, offset = 0x4, fixed_abs, tag = 'smem constant byte address 0x4 - core index']
  #allocation1 [shape = 'u32[144,128]{1,0:T(1,128)}', space=vmem, size = 0x12000, scoped, tag = 'internal scratch']
  %s0 = inlined_call_operand.vmem [shape: f32[12,32], index: 0, kind: input, shape index: {}]
  %s1 = inlined_call_operand.vmem [shape: s32[12,1], index: 1, kind: input, shape index: {}]
  %s2 = inlined_call_operand.hbm [shape: bf16[12,32], index: 2, kind: input, shape index: {}]
  %s3 = inlined_call_operand.hbm [shape: bf16[12,32], index: 3, kind: output, shape index: {0}]
  %s4 = inlined_call_operand.vmem [shape: f32[2,1,1], index: 4, kind: output, shape index: {1}]
  %s5 = inlined_call_operand.vmem [shape: f32[2,1,1], index: 5, kind: output, shape index: {2}]
  %6 = xla_tuple %s3, %s4, %s5
  %s7 = sld [smem:[#allocation0]]
  $region65: #{lwr_losses.1} parent=0
    _
  %s9 = ssub.s32 1, %s7
  %s10 = scalar_select 0, %s9, %s7
  $region1: #{lwr_losses.1} parent=0
    #allocation2 [shape = 'u8[4096]{0}', space=vmem, size = 0x1000, scoped, tag = 'input window, operand 2']
    #allocation3 [shape = 's32[2]{0}', space=sflag, size = 0x8, scoped, tag = 'scoped memory for lwr_losses.1']
    #allocation4 [shape = 's32[2]{0}', space=sflag, size = 0x8, scoped, tag = 'scoped memory for lwr_losses.1']
    #allocation5 [shape = 'u8[4096]{0}', space=vmem, size = 0x1000, scoped, tag = 'output window, operand 0']
    %11 = vsyncpa [#allocation3], 0
    %s12 = scalar_lea.sflag [#allocation3], 1
    %13 = vsyncpa %s12, 0
    %14 = vsyncpa [#allocation4], 0
    %s15 = scalar_lea.sflag [#allocation4], 1
    %16 = vsyncpa %s15, 0
    loop: start=0, step=1, limit=4
    $region2: #{lwr_losses.1} parent=1 // loop_pre_header
      _
    $region3: #{lwr_losses.1} parent=1 // loop_header
      %s18 = sphi 0, %s22
      %p19 = scmp.ge.s32.totalorder %s18, 4
      %s28 = sphi 0, %s30
      %s31 = sphi 0, %s28
      %s32 = sphi 0, %s31
      %s48 = sphi 0, %s32
      %s54 = sphi 0, %s56
      %s57 = sphi 0, %s54
      %s58 = sphi 0, %s57
      %s74 = sphi 0, %s58
      %s80 = sphi 0, %s82
      %s83 = sphi 0, %s80
      %s84 = sphi 0, %s83
      %s100 = sphi 0, %s84
      %s106 = sphi 0, %s108
      %s109 = sphi 0, %s106
      %s110 = sphi 0, %s109
      %s126 = sphi 0, %s110
      %s132 = sphi 0, %s134
      %s135 = sphi 0, %s132
      %s136 = sphi 0, %s135
      %s152 = sphi 0, %s136
      %s158 = sphi 0, %s160
      %s161 = sphi 0, %s158
      %s162 = sphi 0, %s161
      %s178 = sphi 0, %s162
    $region4: #{lwr_losses.1} parent=1 // loop_header_branch
      %21 = sbr.rel (%p19) target = $region8
    $region5: #{lwr_losses.1} parent=1 // loop_body
      %s23 = ssub.s32 %s18, 1
      %s24 = ssub.s32 %s18, 2
      %s25 = sadd.s32 %s18, 1
      %s26 = ssub.s32 %s18, %s25
      %p27 = scmp.eq.s32.totalorder %s26, 0
      %s29 = sadd.s32 %s28, 1
      %s30 = scalar_select %p27, %s28, %s29
      %p33 = pneg %p27
      %p34 = scmp.eq.s32.totalorder %s18, 1
      %p35 = por %p33, %p34
      %p36 = scmp.ne.s32.totalorder %s28, %s31
      %p37 = scmp.eq.s32.totalorder %s18, 0
      %p38 = por %p36, %p37
      %p39 = scmp.ne.s32.totalorder %s28, %s31
      %p40 = scmp.eq.s32.totalorder %s23, 1
      %p41 = por %p39, %p40
      %p42 = scmp.ne.s32.totalorder %s31, %s32
      %p43 = scmp.eq.s32.totalorder %s23, 0
      %p44 = por %p42, %p43
      %p45 = scmp.ne.s32.totalorder %s31, %s32
      %p46 = scmp.eq.s32.totalorder %s24, 1
      %p47 = por %p45, %p46
      %p49 = scmp.ne.s32.totalorder %s32, %s48
      %p50 = scmp.eq.s32.totalorder %s24, 0
      %p51 = por %p49, %p50
      %s52 = ssub.s32 %s18, %s25
      %p53 = scmp.eq.s32.totalorder %s52, 0
      %s55 = sadd.s32 %s54, 1
      %s56 = scalar_select %p53, %s54, %s55
      %p59 = pneg %p53
      %p60 = scmp.eq.s32.totalorder %s18, 1
      %p61 = por %p59, %p60
      %p62 = scmp.ne.s32.totalorder %s54, %s57
      %p63 = scmp.eq.s32.totalorder %s18, 0
      %p64 = por %p62, %p63
      %p65 = scmp.ne.s32.totalorder %s54, %s57
      %p66 = scmp.eq.s32.totalorder %s23, 1
      %p67 = por %p65, %p66
      %p68 = scmp.ne.s32.totalorder %s57, %s58
      %p69 = scmp.eq.s32.totalorder %s23, 0
      %p70 = por %p68, %p69
      %p71 = scmp.ne.s32.totalorder %s57, %s58
      %p72 = scmp.eq.s32.totalorder %s24, 1
      %p73 = por %p71, %p72
      %p75 = scmp.ne.s32.totalorder %s58, %s74
      %p76 = scmp.eq.s32.totalorder %s24, 0
      %p77 = por %p75, %p76
      %s78 = ssub.s32 %s18, %s25
      %p79 = scmp.eq.s32.totalorder %s78, 0
      %s81 = sadd.s32 %s80, 1
      %s82 = scalar_select %p79, %s80, %s81
      %p85 = pneg %p79
      %p86 = scmp.eq.s32.totalorder %s18, 1
      %p87 = por %p85, %p86
      %p88 = scmp.ne.s32.totalorder %s80, %s83
      %p89 = scmp.eq.s32.totalorder %s18, 0
      %p90 = por %p88, %p89
      %p91 = scmp.ne.s32.totalorder %s80, %s83
      %p92 = scmp.eq.s32.totalorder %s23, 1
      %p93 = por %p91, %p92
      %p94 = scmp.ne.s32.totalorder %s83, %s84
      %p95 = scmp.eq.s32.totalorder %s23, 0
      %p96 = por %p94, %p95
      %p97 = scmp.ne.s32.totalorder %s83, %s84
      %p98 = scmp.eq.s32.totalorder %s24, 1
      %p99 = por %p97, %p98
      %p101 = scmp.ne.s32.totalorder %s84, %s100
      %p102 = scmp.eq.s32.totalorder %s24, 0
      %p103 = por %p101, %p102
      %s104 = ssub.s32 %s18, %s25
      %p105 = scmp.eq.s32.totalorder %s104, 0
      %s107 = sadd.s32 %s106, 1
      %s108 = scalar_select %p105, %s106, %s107
      %p111 = pneg %p105
      %p112 = scmp.eq.s32.totalorder %s18, 1
      %p113 = por %p111, %p112
      %p114 = scmp.ne.s32.totalorder %s106, %s109
      %p115 = scmp.eq.s32.totalorder %s18, 0
      %p116 = por %p114, %p115
      %p117 = scmp.ne.s32.totalorder %s106, %s109
      %p118 = scmp.eq.s32.totalorder %s23, 1
      %p119 = por %p117, %p118
      %p120 = scmp.ne.s32.totalorder %s109, %s110
      %p121 = scmp.eq.s32.totalorder %s23, 0
      %p122 = por %p120, %p121
      %p123 = scmp.ne.s32.totalorder %s109, %s110
      %p124 = scmp.eq.s32.totalorder %s24, 1
      %p125 = por %p123, %p124
      %p127 = scmp.ne.s32.totalorder %s110, %s126
      %p128 = scmp.eq.s32.totalorder %s24, 0
      %p129 = por %p127, %p128
      %s130 = ssub.s32 %s18, %s25
      %p131 = scmp.eq.s32.totalorder %s130, 0
      %s133 = sadd.s32 %s132, 1
      %s134 = scalar_select %p131, %s132, %s133
      %p137 = pneg %p131
      %p138 = scmp.eq.s32.totalorder %s18, 1
      %p139 = por %p137, %p138
      %p140 = scmp.ne.s32.totalorder %s132, %s135
      %p141 = scmp.eq.s32.totalorder %s18, 0
      %p142 = por %p140, %p141
      %p143 = scmp.ne.s32.totalorder %s132, %s135
      %p144 = scmp.eq.s32.totalorder %s23, 1
      %p145 = por %p143, %p144
      %p146 = scmp.ne.s32.totalorder %s135, %s136
      %p147 = scmp.eq.s32.totalorder %s23, 0
      %p148 = por %p146, %p147
      %p149 = scmp.ne.s32.totalorder %s135, %s136
      %p150 = scmp.eq.s32.totalorder %s24, 1
      %p151 = por %p149, %p150
      %p153 = scmp.ne.s32.totalorder %s136, %s152
      %p154 = scmp.eq.s32.totalorder %s24, 0
      %p155 = por %p153, %p154
      %s156 = ssub.s32 %s18, %s25
      %p157 = scmp.eq.s32.totalorder %s156, 0
      %s159 = sadd.s32 %s158, 1
      %s160 = scalar_select %p157, %s158, %s159
      %p163 = pneg %p157
      %p164 = scmp.eq.s32.totalorder %s18, 1
      %p165 = por %p163, %p164
      %p166 = scmp.ne.s32.totalorder %s158, %s161
      %p167 = scmp.eq.s32.totalorder %s18, 0
      %p168 = por %p166, %p167
      %p169 = scmp.ne.s32.totalorder %s158, %s161
      %p170 = scmp.eq.s32.totalorder %s23, 1
      %p171 = por %p169, %p170
      %p172 = scmp.ne.s32.totalorder %s161, %s162
      %p173 = scmp.eq.s32.totalorder %s23, 0
      %p174 = por %p172, %p173
      %p175 = scmp.ne.s32.totalorder %s161, %s162
      %p176 = scmp.eq.s32.totalorder %s24, 1
      %p177 = por %p175, %p176
      %p179 = scmp.ne.s32.totalorder %s162, %s178
      %p180 = scmp.eq.s32.totalorder %s24, 0
      %p181 = por %p179, %p180
      %p182 = scmp.le.s32.totalorder 1, %s18
      %p183 = scmp.lt.s32.totalorder %s18, 3
      %p184 = pnand %p182, %p183
      %p185 = pneg %p184
      // Predicated region
      $region9: #{lwr_losses.1} parent=5 // pred_check
        _
      $region10: #{lwr_losses.1} parent=5 // pred_check_branch
        %187 = sbr.rel (%p184) target = $region12
      $region11: #{lwr_losses.1} parent=5 // pred_region
        %s188 = ssub.s32 %s18, 1
      $region12: #{lwr_losses.1} parent=5 // pred_fallthru
        _
      %p189 = scmp.lt.s32.totalorder %s18, 2
      // Predicated region
      $region13: #{lwr_losses.1} parent=5 // pred_check
        %p190 = pneg %p189
      $region14: #{lwr_losses.1} parent=5 // pred_check_branch
        %192 = sbr.rel (%p190) target = $region16
      $region15: #{lwr_losses.1} parent=5 // pred_region
        // Predicated region
        $region17: #{lwr_losses.1} parent=15 // pred_check
          %p193 = pneg %p38
        $region18: #{lwr_losses.1} parent=15 // pred_check_branch
          %195 = sbr.rel (%p193) target = $region20
        $region19: #{lwr_losses.1} parent=15 // pred_region
          %p196 = scmp.lt.s32.totalorder %s18, 1
          %s197 = scalar_select %p196, %s18, 1
          %s198 = smul.addr %s197, 8
          %s199 = scalar_lea.vmem %s0, %s198
        $region20: #{lwr_losses.1} parent=15 // pred_fallthru
          _
        // Predicated region
        $region21: #{lwr_losses.1} parent=15 // pred_check
          %p200 = pneg %p64
        $region22: #{lwr_losses.1} parent=15 // pred_check_branch
          %202 = sbr.rel (%p200) target = $region24
        $region23: #{lwr_losses.1} parent=15 // pred_region
          %p203 = scmp.lt.s32.totalorder %s18, 1
          %s204 = scalar_select %p203, %s18, 1
          %s205 = smul.addr %s204, 8
          %s206 = scalar_lea.vmem %s1, %s205
        $region24: #{lwr_losses.1} parent=15 // pred_fallthru
          _
        // Predicated region
        $region25: #{lwr_losses.1} parent=15 // pred_check
          %p207 = pneg %p90
        $region26: #{lwr_losses.1} parent=15 // pred_check_branch
          %209 = sbr.rel (%p207) target = $region28
        $region27: #{lwr_losses.1} parent=15 // pred_region
          %s210 = sand.u32 %s80, 1
          %s211 = scalar_lea.sflag [#allocation3], %s210
          %s212 = sand.u32 %s80, 1
          %s213 = smul.addr %s212, 4
          %s214 = scalar_lea.vmem [#allocation2], %s213
          %s216 = ssub.s32 64, 64
          %217 = vsyncadd %s211, %s216
          %s218 = smul.addr %s18, 64
          %s219 = scalar_lea.hbm %s2, %s218
          %s221 = sshll.u32 %s214, 4
          %s222 = int_to_ptr.vmem [resolvable:$true] %s221
          %224 = dma.hbm_to_vmem [thread:$0]  %s219, 64, %s222, %s211
        $region28: #{lwr_losses.1} parent=15 // pred_fallthru
          _
      $region16: #{lwr_losses.1} parent=5 // pred_fallthru
        _
      %p225 = scmp.le.s32.totalorder 1, %s18
      %p226 = scmp.lt.s32.totalorder %s18, 3
      %p227 = pnand %p225, %p226
      %p228 = pneg %p227
      // Predicated region
      $region29: #{lwr_losses.1} parent=5 // pred_check
        _
      $region30: #{lwr_losses.1} parent=5 // pred_check_branch
        %230 = sbr.rel (%p227) target = $region32
      $region31: #{lwr_losses.1} parent=5 // pred_region
        %s231 = ssub.s32 %s18, 1
        %s232 = sand.u32 %s83, 1
        %s233 = scalar_lea.sflag [#allocation3], %s232
        %s234 = sand.u32 %s83, 1
        %s235 = smul.addr %s234, 4
        %s236 = scalar_lea.vmem [#allocation2], %s235
        // Predicated region
        $region33: #{lwr_losses.1} parent=31 // pred_check
          %p237 = pneg %p96
        $region34: #{lwr_losses.1} parent=31 // pred_check_branch
          %239 = sbr.rel (%p237) target = $region36
        $region35: #{lwr_losses.1} parent=31 // pred_region
          %240 = dma.done %s233, 64
        $region36: #{lwr_losses.1} parent=31 // pred_fallthru
          _
        %p241 = scmp.lt.s32.totalorder %s23, 1
        %s242 = scalar_select %p241, %s23, 1
        %s243 = smul.addr %s242, 8
        %s244 = scalar_lea.vmem %s0, %s243
        %p245 = pneg %p44
        %p246 = pneg %p41
        %p247 = scmp.lt.s32.totalorder %s23, 1
        %s248 = scalar_select %p247, %s23, 1
        %s249 = smul.addr %s248, 8
        %s250 = scalar_lea.vmem %s1, %s249
        %p251 = pneg %p70
        %p252 = pneg %p67
        %s253 = sand.u32 %s83, 1
        %s254 = scalar_lea.sflag [#allocation3], %s253
        %s255 = sand.u32 %s83, 1
        %s256 = smul.addr %s255, 4
        %s257 = scalar_lea.vmem [#allocation2], %s256
        %p258 = pneg %p96
        %p259 = pneg %p93
        %p260 = pneg %p122
        %p261 = pneg %p119
        %s262 = sand.u32 %s109, 1
        %s263 = scalar_lea.sflag [#allocation4], %s262
        %s264 = sand.u32 %s109, 1
        %s265 = smul.addr %s264, 4
        %s266 = scalar_lea.vmem [#allocation5], %s265
        %p267 = pneg %p148
        %p268 = pneg %p145
        %p269 = scmp.lt.s32.totalorder %s23, 1
        %s270 = scalar_select %p269, %s23, 1
        %s271 = scalar_lea.vmem %s4, %s270
        %p272 = pneg %p174
        %p273 = pneg %p171
        %p274 = scmp.lt.s32.totalorder %s23, 1
        %s275 = scalar_select %p274, %s23, 1
        %s276 = scalar_lea.vmem %s5, %s275
        %p277 = scmp.lt.s32.totalorder %s23, 1
        %s278 = scalar_select %p277, %s23, 1
        %s279 = smul.addr %s278, 8
        %s280 = scalar_lea.vmem %s0, %s279
        %p281 = scmp.lt.s32.totalorder %s23, 1
        %s282 = scalar_select %p281, %s23, 1
        %s283 = smul.addr %s282, 8
        %s284 = scalar_lea.vmem %s1, %s283
        %p285 = scmp.lt.s32.totalorder %s23, 1
        %s286 = scalar_select %p285, %s23, 1
        %s287 = scalar_lea.vmem %s4, %s286
        %p288 = scmp.lt.s32.totalorder %s23, 1
        %s289 = scalar_select %p288, %s23, 1
        %s290 = scalar_lea.vmem %s5, %s289
        %v291 = vld [vmem:[%s280] sm:$0xff]
        %v292 = vlaneseq
        %v293 = vshrl.u32 %v292, 7
        %s294 = smul.u32 %s23, 8
        %v295 = vstv %s294
        %v296 = vadd.s32 %v293, %v295
        %vm297 = vcmp.lt.s32.totalorder %v296, 12
        %v298 = vsel %vm297, 1, 0
        %vm299 = vcmp.eq.s32.totalorder %v298, 1
        %v300 = vsel %vm299, %v291, 0.0
        %v301 = vld [vmem:[%s284] sm:$0xff]
        %v302 = vlaneseq
        %v303 = vand.u32 %v302, 127
        %304 = vset.pattern.permute.xlu0 0
        %305 = vperm.xlu0 %304, %v301
        %v306 = vpop.permute.xlu0 %305
        %vm307 = vcmp.eq.s32.totalorder %v303, %v306
        %v308 = vsel %vm307, %v300, 0.0
        %vm309 = vcmask 261120
        %v310 = vsel %vm309, %v308, 0.0
        %311 = vadd.xlane.f32.xlu0 %v310
        %v312 = vpop.xlane.xlu0 %311
        %v313 = vsel %vm309, %v300, -inf
        %314 = vmax.xlane.f32.xlu0 %v313
        %v315 = vpop.xlane.xlu0 %314
        %v316 = vsub.f32 %v300, %v315
        %v317 = vmul.f32 %v316, 1.442695
        %v318 = vpow.pop %v317
        %v319 = vsel %vm309, %v318, 0.0
        %320 = vadd.xlane.f32.xlu0 %v319
        %v321 = vpop.xlane.xlu0 %320
        %v322 = vlog2.pop %v321
        %v323 = vmul.f32 %v322, 0.6931472
        %v324 = vadd.f32 %v315, %v323
        %v325 = vsub.f32 %v324, %v312
        %v326 = vsel %vm297, %v325, 0.0
        %vm327 = vcmask 7168
        %v328 = vsel %vm327, %v326, 0.0
        %329 = vadd.xlane.f32.xlu0 %v328
        %v330 = vpop.xlane.xlu0 %329
        %v331 = vrot.slane %v330, 4
        %v332 = vadd.f32 %v330, %v331
        %v333 = vrot.slane %v332, 2
        %v334 = vadd.f32 %v332, %v333
        %v335 = vrot.slane %v334, 1
        %v336 = vadd.f32 %v334, %v335
        %s337 = vtos %v336
        %v338 = vstv %s337
        %vm339 = vcmask 0
        %340 = vst.msk [vmem:[%s287] sm:$0x1] %vm339, %v338
        %v341 = vmul.f32 %v300, 0.2
        %v342 = vmul.f32 %v315, 0.2
        %v343 = vsub.f32 %v341, %v342
        %v344 = vmul.f32 %v343, 1.442695
        %v345 = vpow.pop %v344
        %v346 = vsel %vm309, %v345, 0.0
        %347 = vadd.xlane.f32.xlu0 %v346
        %v348 = vpop.xlane.xlu0 %347
        %v349 = vrcp.pop %v348
        %v350 = vmul.f32 %v345, %v349
        %v351 = vpack.c.bf16 %v350, %v350
        %vm352 = vcmask 257024
        %353 = vst.msk [vmem:[%s266] sm:$0xf] %vm352, %v351
        %v354 = vlog2.pop %v348
        %v355 = vmul.f32 %v354, 0.6931472
        %v356 = vsub.f32 %v343, %v355
        %v357 = vld [vmem:[%s236] sm:$0xf]
        %v358 = vunpack.c.l.bf16 %v357
        %v359 = vsel %vm299, %v358, 0.0
        %vm360 = vcmp.gt.f32.partialorder %v359, 0.0
        %v361 = vsel %vm360, %v359, 1.0
        %v362 = vlog2.pop %v361
        %v363 = vmul.f32 %v362, 0.6931472
        %v364 = vsub.f32 %v363, %v356
        %v365 = vmul.f32 %v359, %v364
        %v366 = vsel %vm360, %v365, 0.0
        %v367 = vsel %vm309, %v366, 0.0
        %368 = vadd.xlane.f32.xlu0 %v367
        %v369 = vpop.xlane.xlu0 %368
        %v370 = vrot.slane %v369, 4
        %v371 = vadd.f32 %v369, %v370
        %v372 = vrot.slane %v371, 2
        %v373 = vadd.f32 %v371, %v372
        %v374 = vrot.slane %v373, 1
        %v375 = vadd.f32 %v373, %v374
        %s376 = vtos %v375
        %v377 = vstv %s376
        %378 = vst.msk [vmem:[%s290] sm:$0x1] %vm339, %v377
        %s379 = sand.u32 %s109, 1
        %s380 = scalar_lea.sflag [#allocation4], %s379
        %s381 = sand.u32 %s109, 1
        %s382 = smul.addr %s381, 4
        %s383 = scalar_lea.vmem [#allocation5], %s382
        %p384 = scmp.lt.s32.totalorder %s23, 1
        %s385 = scalar_select %p384, %s23, 1
        %s386 = scalar_lea.vmem %s4, %s385
        %p387 = scmp.lt.s32.totalorder %s23, 1
        %s388 = scalar_select %p387, %s23, 1
        %s389 = scalar_lea.vmem %s5, %s388
        // Predicated region
        $region37: #{lwr_losses.1} parent=31 // pred_check
          %p390 = pneg %p119
        $region38: #{lwr_losses.1} parent=31 // pred_check_branch
          %392 = sbr.rel (%p390) target = $region40
        $region39: #{lwr_losses.1} parent=31 // pred_region
          %s394 = ssub.s32 64, 64
          %395 = vsyncadd %s380, %s394
          %s396 = smul.addr %s23, 64
          %s397 = scalar_lea.hbm %s3, %s396
          %s399 = sshll.u32 %s383, 4
          %s400 = int_to_ptr.vmem [resolvable:$true] %s399
          %402 = dma.vmem_to_hbm [thread:$0]  %s400, 64, %s397, %s380
        $region40: #{lwr_losses.1} parent=31 // pred_fallthru
          _
        // Predicated region
        $region41: #{lwr_losses.1} parent=31 // pred_check
          %p403 = pneg %p145
        $region42: #{lwr_losses.1} parent=31 // pred_check_branch
          %405 = sbr.rel (%p403) target = $region44
        $region43: #{lwr_losses.1} parent=31 // pred_region
          _
        $region44: #{lwr_losses.1} parent=31 // pred_fallthru
          _
        // Predicated region
        $region45: #{lwr_losses.1} parent=31 // pred_check
          %p406 = pneg %p171
        $region46: #{lwr_losses.1} parent=31 // pred_check_branch
          %408 = sbr.rel (%p406) target = $region48
        $region47: #{lwr_losses.1} parent=31 // pred_region
          _
        $region48: #{lwr_losses.1} parent=31 // pred_fallthru
          _
      $region32: #{lwr_losses.1} parent=5 // pred_fallthru
        _
      %p409 = scmp.le.s32.totalorder 2, %s18
      // Predicated region
      $region49: #{lwr_losses.1} parent=5 // pred_check
        %p410 = pneg %p409
      $region50: #{lwr_losses.1} parent=5 // pred_check_branch
        %412 = sbr.rel (%p410) target = $region52
      $region51: #{lwr_losses.1} parent=5 // pred_region
        %s413 = ssub.s32 %s18, 2
        // Predicated region
        $region53: #{lwr_losses.1} parent=51 // pred_check
          %p414 = pneg %p125
        $region54: #{lwr_losses.1} parent=51 // pred_check_branch
          %416 = sbr.rel (%p414) target = $region56
        $region55: #{lwr_losses.1} parent=51 // pred_region
          %s417 = sand.u32 %s110, 1
          %s418 = scalar_lea.sflag [#allocation4], %s417
          %s419 = sand.u32 %s110, 1
          %s420 = smul.addr %s419, 4
          %s421 = scalar_lea.vmem [#allocation5], %s420
          %422 = dma.done %s418, 64
        $region56: #{lwr_losses.1} parent=51 // pred_fallthru
          _
        // Predicated region
        $region57: #{lwr_losses.1} parent=51 // pred_check
          %p423 = pneg %p151
        $region58: #{lwr_losses.1} parent=51 // pred_check_branch
          %425 = sbr.rel (%p423) target = $region60
        $region59: #{lwr_losses.1} parent=51 // pred_region
          %p426 = scmp.lt.s32.totalorder %s24, 1
          %s427 = scalar_select %p426, %s24, 1
          %s428 = scalar_lea.vmem %s4, %s427
        $region60: #{lwr_losses.1} parent=51 // pred_fallthru
          _
        // Predicated region
        $region61: #{lwr_losses.1} parent=51 // pred_check
          %p429 = pneg %p177
        $region62: #{lwr_losses.1} parent=51 // pred_check_branch
          %431 = sbr.rel (%p429) target = $region64
        $region63: #{lwr_losses.1} parent=51 // pred_region
          %p432 = scmp.lt.s32.totalorder %s24, 1
          %s433 = scalar_select %p432, %s24, 1
          %s434 = scalar_lea.vmem %s5, %s433
        $region64: #{lwr_losses.1} parent=51 // pred_fallthru
          _
      $region52: #{lwr_losses.1} parent=5 // pred_fallthru
        _
    $region6: #{lwr_losses.1} parent=1 // loop_footer
      %s22 = sadd.s32 1, %s18
    $region7: #{lwr_losses.1} parent=1 // loop_footer_branch
      %17 = sbr.rel target = $region3
    $region8: #{lwr_losses.1} parent=1 // loop_exit
      _
    %435 = vsyncpa [#allocation3], 1
    %s436 = scalar_lea.sflag [#allocation3], 1
    %437 = vsyncpa %s436, 1
    %438 = vsyncpa [#allocation4], 1
    %s439 = scalar_lea.sflag [#allocation4], 1
    %440 = vsyncpa %s439, 1

</llo_original>
